<compile_context>
chip_gen: v7x
topology: tpu7x:2x2x1
jax: 0.10.0
libtpu: 0.0.40
codegen_flags: <defaults>
</compile_context>

<pallas_src>
import jax
import jax.numpy as jnp
import numpy as np
from jax.experimental import pallas as pl
from jax.experimental.pallas import tpu as pltpu

_LANE = 128          # TPU lane width (last vreg dim)
_SUBLANE = 8         # f32 sublane count (second-to-last vreg dim)
_MAX_BLOCK_ROWS = 1024   # 1024 * 128 * 4 B = 512 KiB per buffer -> fits VMEM easily


def _identity_kernel(x_ref, o_ref):
    # Straight VMEM tile copy: full-width load, full-width (lane-dense) store.
    o_ref[...] = x_ref[...]


def identity_pallas(x):
    """Identity forward: returns an array equal to `x` (same shape, dtype)."""
    orig_shape = x.shape
    n = x.size

    # Flatten and pad up to a multiple of one (8, 128) f32 tile so the 2-D
    # view always satisfies the TPU tiling constraint.
    flat = x.reshape(-1)
    pad = (-n) % (_LANE * _SUBLANE)
    if pad:
        flat = jnp.pad(flat, (0, pad))
    rows = flat.size // _LANE
    x2d = flat.reshape(rows, _LANE)

    # Fold everything into one block when it fits; otherwise tile over rows.
    block_rows = min(rows, _MAX_BLOCK_ROWS)
    rows_padded = ((rows + block_rows - 1) // block_rows) * block_rows
    if rows_padded != rows:
        x2d = jnp.pad(x2d, ((0, rows_padded - rows), (0, 0)))
        rows = rows_padded
    grid = (rows // block_rows,)

    out2d = pl.pallas_call(
        _identity_kernel,
        out_shape=jax.ShapeDtypeStruct((rows, _LANE), x2d.dtype),
        grid=grid,
        in_specs=[pl.BlockSpec((block_rows, _LANE), lambda i: (i, 0))],
        out_specs=pl.BlockSpec((block_rows, _LANE), lambda i: (i, 0)),
        # Each row-tile is independent -> "parallel" lets v7x shard the grid
        # across both TensorCores; harmless no-op on single-TC v5e/v6e.
        compiler_params=pltpu.CompilerParams(
            dimension_semantics=("parallel",)),
    )(x2d)

    return out2d.reshape(-1)[:n].reshape(orig_shape)


if __name__ == "__main__":
    key = jax.random.PRNGKey(0)
    # Small shapes consistent with the module (identity accepts any shape).
    x = jax.random.normal(key, (2, 4, 16, 16), dtype=jnp.float32)

    out = jax.block_until_ready(jax.jit(identity_pallas)(x))

    # Reference: identity is exact.
    np.testing.assert_array_equal(np.asarray(out), np.asarray(x))
    assert out.shape == x.shape and out.dtype == x.dtype
    print("KERNEL_OK")
</pallas_src>

<mosaic_0001>
module attributes {stable_mosaic.version = 11 : i64} {
  func.func @_identity_kernel(%arg0: i32, %arg1: memref<16x128xf32, #tpu.memory_space<vmem>>, %arg2: memref<16x128xf32, #tpu.memory_space<vmem>>) attributes {dimension_semantics = [#tpu.dimension_semantics<parallel>], iteration_bounds = array<i64: 1>, scalar_prefetch = 0 : i64, scratch_operands = 0 : i64, tpu.core_type = #tpu.core_type<tc>, window_params = [{transform_indices = @transform_0, window_bounds = array<i64: 16, 128>}, {transform_indices = @transform_1, window_bounds = array<i64: 16, 128>}]} {
    %c0 = arith.constant 0 : index
    %c0_0 = arith.constant 0 : index
    %0 = vector.load %arg1[%c0, %c0_0] : memref<16x128xf32, #tpu.memory_space<vmem>>, vector<16x128xf32>
    %c0_1 = arith.constant 0 : index
    %c0_2 = arith.constant 0 : index
    %1 = vector.load %arg2[%c0_1, %c0_2] : memref<16x128xf32, #tpu.memory_space<vmem>>, vector<16x128xf32>
    tpu.vector_store %arg2[%c0_1, %c0_2], %0 {strides = array<i32>} : memref<16x128xf32, #tpu.memory_space<vmem>>, vector<16x128xf32>,
    return
  }
  func.func @transform_0(%arg0: i32) -> (i32, i32) {
    %c0_i32 = arith.constant 0 : i32
    %c0_i32_0 = arith.constant 0 : i32
    return %arg0, %c0_i32 : i32, i32
  }
  func.func @transform_1(%arg0: i32) -> (i32, i32) {
    %c0_i32 = arith.constant 0 : i32
    %c0_i32_0 = arith.constant 0 : i32
    return %arg0, %c0_i32 : i32, i32
  }
}

</mosaic_0001>

<llo_original>
// kernel: identity_pallas.1
$region0: #{identity_pallas.1}
  #allocation0 [shape = 'u32[]', space=smem, size = 0x4, offset = 0x4, fixed_abs, tag = 'smem constant byte address 0x4 - core index']
  #allocation1 [shape = 'u32[144,128]{1,0:T(1,128)}', space=vmem, size = 0x12000, scoped, tag = 'internal scratch']
  %s0 = inlined_call_operand.vmem [shape: f32[16,128], index: 0, kind: input, shape index: {}]
  %s1 = inlined_call_operand.vmem [shape: f32[16,128], index: 1, kind: output, shape index: {}]
  %s2 = sld [smem:[#allocation0]]
  $region14: #{identity_pallas.1} parent=0
    _
  %s4 = ssub.s32 1, %s2
  %s5 = scalar_select 0, %s4, %s2
  // Predicated region
  $region2: #{identity_pallas.1} parent=0 // pred_check
    _
  $region3: #{identity_pallas.1} parent=0 // pred_check_branch
    %7 = sbr.rel (0) target = $region5
  $region4: #{identity_pallas.1} parent=0 // pred_region
    _
  $region5: #{identity_pallas.1} parent=0 // pred_fallthru
    _
  %v8 = vld [vmem:[%s0] sm:$0xff]
  %v9 = vld [vmem:[%s0 + $0x8] sm:$0xff]
  %10 = vst [vmem:[%s1] sm:$0xff] %v8
  %11 = vst [vmem:[%s1 + $0x8] sm:$0xff] %v9
  // Predicated region
  $region6: #{identity_pallas.1} parent=0 // pred_check
    _
  $region7: #{identity_pallas.1} parent=0 // pred_check_branch
    %13 = sbr.rel (0) target = $region9
  $region8: #{identity_pallas.1} parent=0 // pred_region
    _
  $region9: #{identity_pallas.1} parent=0 // pred_fallthru
    _
  // Predicated region
  $region10: #{identity_pallas.1} parent=0 // pred_check
    _
  $region11: #{identity_pallas.1} parent=0 // pred_check_branch
    %15 = sbr.rel (0) target = $region13
  $region12: #{identity_pallas.1} parent=0 // pred_region
    _
  $region13: #{identity_pallas.1} parent=0 // pred_fallthru
    _

</llo_original>
